<compile_context>
chip_gen: v5e
topology: v5e:2x2
jax: 0.10.0
libtpu: 0.0.40
codegen_flags: <defaults>
</compile_context>

<pallas_src>
import functools

import jax
import jax.numpy as jnp
from jax.experimental import pallas as pl
from jax.experimental.pallas import tpu as pltpu


def _round_up(x, m):
    return ((x + m - 1) // m) * m


def _cdiv(a, b):
    return -(-a // b)


def _sae_kernel(x_ref, w_ref, b_ref, o_ref):
    """Fused 4-layer tanh MLP.

    x_ref:  (bt, F)    bf16 input tile
    w_ref:  (4, F, F)  bf16 packed, zero-padded weights (y = x @ W + b layout)
    b_ref:  (4, 1, F)  f32 packed, zero-padded biases
    o_ref:  (bt, F)    f32 output tile
    """
    h = x_ref[...]  # bf16 (bt, F)

    # Layers 1-3: MXU matmul with f32 accumulation, bias-add in f32, tanh in
    # bf16 (v6e/v7x EUP runs bf16 at ~2x; on v5e it is promoted -> neutral).
    for k in range(3):
        acc = jnp.dot(h, w_ref[k], preferred_element_type=jnp.float32)
        h = jnp.tanh((acc + b_ref[k]).astype(jnp.bfloat16))

    # Final layer: keep bias-add and tanh in f32 for output fidelity.
    acc = jnp.dot(h, w_ref[3], preferred_element_type=jnp.float32)
    o_ref[...] = jnp.tanh(acc + b_ref[3]).astype(o_ref.dtype)


def pack_params(params, feat):
    """Zero-pad each (in, out) weight to (feat, feat) / bias to (1, feat), stack.

    Zero padding is exact: padded lanes see tanh(0 + 0) = 0 and multiply only
    against zero weight rows downstream, contributing nothing.
    Called once outside the jitted forward so the pad/cast is hoisted.
    """
    ws, bs = [], []
    for k in range(1, 5):
        w = params[f"w{k}"]
        b = params[f"b{k}"]
        r, c = w.shape
        ws.append(jnp.pad(w.astype(jnp.bfloat16), ((0, feat - r), (0, feat - c))))
        bs.append(jnp.pad(b.astype(jnp.float32), ((0, 0), (0, feat - b.shape[1]))))
    return jnp.stack(ws, axis=0), jnp.stack(bs, axis=0)


def _pick_batch_tiling(B, max_tile=8192):
    """Choose (batch_tile, padded_B, n_steps).

    - Tiles capped at max_tile rows (~3 MiB/tile of I/O -> fits VMEM with
      double-buffering on every gen, incl. v7x's smaller VMEM).
    - Tile = round_up(cdiv(B, n_steps), 16) minimizes batch-pad waste and keeps
      native bf16 sublane packing (multiples of 16).
    - For large batches keep >= 2 "parallel" grid steps so the v7x megacore
      can shard the batch axis across its 2 TensorCores.
    """
    n_steps = max(1, _cdiv(B, max_tile))
    if B >= 4096 and n_steps < 2:
        n_steps = 2
    bt = _round_up(_cdiv(B, n_steps), 16)
    return bt, bt * n_steps, n_steps


@jax.jit
def stacked_autoencoder_forward(x, w_packed, b_packed):
    """Fused Stacked_Autoencoder forward.

    x:         (B, word_dims) f32
    w_packed:  (4, F, F)  bf16  (from pack_params)
    b_packed:  (4, 1, F)  f32   (from pack_params)
    """
    B, D = x.shape
    F = w_packed.shape[-1]
    bt, Bp, n_steps = _pick_batch_tiling(B)

    # Single fused pad+cast pass over x (batch pad only; no lane pad when D==F).
    xp = jnp.pad(x.astype(jnp.bfloat16), ((0, Bp - B), (0, F - D)))

    cost = pl.CostEstimate(
        flops=2 * Bp * F * F * 4,
        transcendentals=Bp * F * 4,
        bytes_accessed=Bp * F * 2      # bf16 input stream
        + Bp * F * 4                   # f32 output stream
        + 4 * F * F * 2                # resident bf16 weights
        + 4 * F * 4,                   # resident f32 biases
    )

    out = pl.pallas_call(
        _sae_kernel,
        out_shape=jax.ShapeDtypeStruct((Bp, F), jnp.float32),
        grid_spec=pltpu.PrefetchScalarGridSpec(
            num_scalar_prefetch=0,
            grid=(n_steps,),
            in_specs=[
                pl.BlockSpec((bt, F), lambda i: (i, 0)),       # x tile (lane = full dim)
                pl.BlockSpec((4, F, F), lambda i: (0, 0, 0)),  # packed weights (resident)
                pl.BlockSpec((4, 1, F), lambda i: (0, 0, 0)),  # packed biases (resident)
            ],
            out_specs=pl.BlockSpec((bt, F), lambda i: (i, 0)),
        ),
        compiler_params=pltpu.CompilerParams(
            dimension_semantics=("parallel",),
            vmem_limit_bytes=32 * 1024 * 1024,
        ),
        cost_estimate=cost,
    )(xp, w_packed, b_packed)

    # Strip batch padding (and any lane padding, a no-op when D == F).
    return out[:B, :D]


def init_params(key, word_dims, hidden_dim, dtype=jnp.float32):
    """Init mimicking PyTorch nn.Linear default (U[-1/sqrt(fan_in), +1/sqrt(fan_in)])."""
    def linear(key, fan_in, fan_out):
        kw, kb = jax.random.split(key)
        bound = 1.0 / jnp.sqrt(jnp.float32(fan_in))
        w = jax.random.uniform(kw, (fan_in, fan_out), dtype, -bound, bound)
        b = jax.random.uniform(kb, (1, fan_out), dtype, -bound, bound)
        return w, b

    k1, k2, k3, k4 = jax.random.split(key, 4)
    H = hidden_dim
    w1, b1 = linear(k1, word_dims, 2 * H)
    w2, b2 = linear(k2, 2 * H, H)
    w3, b3 = linear(k3, H, H)
    # See TODO above: fc4 implemented with in_features = hidden_dim.
    w4, b4 = linear(k4, H, word_dims)
    return dict(w1=w1, b1=b1, w2=w2, b2=b2, w3=w3, b3=b3, w4=w4, b4=b4)


def reference_forward(x, params):
    """Pure-JAX f32 reference for correctness checking."""
    h = jnp.tanh(x @ params["w1"] + params["b1"])
    h = jnp.tanh(h @ params["w2"] + params["b2"])
    h = jnp.tanh(h @ params["w3"] + params["b3"])
    return jnp.tanh(h @ params["w4"] + params["b4"])


if __name__ == "__main__":
    # args: word_dims=64 (<101) with fixed_dim=32 -> hidden_dim=32,
    #       activations='tanh', dropout=True (eval -> identity).
    batch = 8
    word_dims = 64
    hidden_dim = 32

    key = jax.random.PRNGKey(0)
    kx, kp = jax.random.split(key)

    x = jax.random.normal(kx, (batch, word_dims), dtype=jnp.float32)
    params = init_params(kp, word_dims, hidden_dim)

    # Pack / pad weights once, outside the jitted forward.
    feat = _round_up(max(word_dims, 2 * hidden_dim), 8)
    w_packed, b_packed = pack_params(params, feat)

    out = stacked_autoencoder_forward(x, w_packed, b_packed)
    out = jax.block_until_ready(out)

    ref = reference_forward(x, params)
    assert out.shape == (batch, word_dims)
    # bf16 matmul operands + bf16 tanh on layers 1-3 (f32 accumulation / final
    # layer in f32): loosened tolerance vs the all-f32 reference.
    assert jnp.allclose(out, ref, atol=5e-2, rtol=0.0), "mismatch vs reference"

    print("KERNEL_OK")
</pallas_src>

<mosaic_0001>
module attributes {stable_mosaic.version = 11 : i64} {
  func.func @_sae_kernel(%arg0: i32, %arg1: memref<16x64xbf16, #tpu.memory_space<vmem>>, %arg2: memref<4x64x64xbf16, #tpu.memory_space<vmem>>, %arg3: memref<4x1x64xf32, #tpu.memory_space<vmem>>, %arg4: memref<16x64xf32, #tpu.memory_space<vmem>>) attributes {dimension_semantics = [#tpu.dimension_semantics<parallel>], iteration_bounds = array<i64: 1>, scalar_prefetch = 0 : i64, scratch_operands = 0 : i64, tpu.core_type = #tpu.core_type<tc>, window_params = [{transform_indices = @transform_0, window_bounds = array<i64: 16, 64>}, {pipeline_mode = #tpu.pipeline_mode<synchronous>, transform_indices = @transform_1, window_bounds = array<i64: 4, 64, 64>}, {pipeline_mode = #tpu.pipeline_mode<synchronous>, transform_indices = @transform_2, window_bounds = array<i64: 4, 1, 64>}, {transform_indices = @transform_3, window_bounds = array<i64: 16, 64>}]} {
    %c0 = arith.constant 0 : index
    %c0_0 = arith.constant 0 : index
    %0 = vector.load %arg1[%c0, %c0_0] : memref<16x64xbf16, #tpu.memory_space<vmem>>, vector<16x64xbf16>
    %c0_1 = arith.constant 0 : index
    %c0_2 = arith.constant 0 : index
    %c0_3 = arith.constant 0 : index
    %1 = vector.load %arg2[%c0_1, %c0_2, %c0_3] : memref<4x64x64xbf16, #tpu.memory_space<vmem>>, vector<1x64x64xbf16>
    %2 = vector.shape_cast %1 : vector<1x64x64xbf16> to vector<64x64xbf16>
    %cst = arith.constant dense<0.000000e+00> : vector<16x64xf32>
    %3 = tpu.matmul %0, %2, %cst {dimension_numbers = #tpu.dot_dimension_numbers<[1], [0], [0], [1], [0, 0, 1, 1], [], []>} : vector<16x64xbf16>, vector<64x64xbf16>, vector<16x64xf32> -> vector<16x64xf32>
    %c0_4 = arith.constant 0 : index
    %c0_5 = arith.constant 0 : index
    %c0_6 = arith.constant 0 : index
    %4 = vector.load %arg3[%c0_4, %c0_5, %c0_6] : memref<4x1x64xf32, #tpu.memory_space<vmem>>, vector<1x1x64xf32>
    %5 = vector.shape_cast %4 : vector<1x1x64xf32> to vector<1x64xf32>
    %6 = vector.broadcast %5 : vector<1x64xf32> to vector<16x64xf32>
    %7 = arith.addf %3, %6 : vector<16x64xf32>
    %8 = arith.truncf %7 : vector<16x64xf32> to vector<16x64xbf16>
    %9 = math.tanh %8 : vector<16x64xbf16>
    %c1 = arith.constant 1 : index
    %c0_7 = arith.constant 0 : index
    %c0_8 = arith.constant 0 : index
    %10 = vector.load %arg2[%c1, %c0_7, %c0_8] : memref<4x64x64xbf16, #tpu.memory_space<vmem>>, vector<1x64x64xbf16>
    %11 = vector.shape_cast %10 : vector<1x64x64xbf16> to vector<64x64xbf16>
    %cst_9 = arith.constant dense<0.000000e+00> : vector<16x64xf32>
    %12 = tpu.matmul %9, %11, %cst_9 {dimension_numbers = #tpu.dot_dimension_numbers<[1], [0], [0], [1], [0, 0, 1, 1], [], []>} : vector<16x64xbf16>, vector<64x64xbf16>, vector<16x64xf32> -> vector<16x64xf32>
    %c1_10 = arith.constant 1 : index
    %c0_11 = arith.constant 0 : index
    %c0_12 = arith.constant 0 : index
    %13 = vector.load %arg3[%c1_10, %c0_11, %c0_12] : memref<4x1x64xf32, #tpu.memory_space<vmem>>, vector<1x1x64xf32>
    %14 = vector.shape_cast %13 : vector<1x1x64xf32> to vector<1x64xf32>
    %15 = vector.broadcast %14 : vector<1x64xf32> to vector<16x64xf32>
    %16 = arith.addf %12, %15 : vector<16x64xf32>
    %17 = arith.truncf %16 : vector<16x64xf32> to vector<16x64xbf16>
    %18 = math.tanh %17 : vector<16x64xbf16>
    %c2 = arith.constant 2 : index
    %c0_13 = arith.constant 0 : index
    %c0_14 = arith.constant 0 : index
    %19 = vector.load %arg2[%c2, %c0_13, %c0_14] : memref<4x64x64xbf16, #tpu.memory_space<vmem>>, vector<1x64x64xbf16>
    %20 = vector.shape_cast %19 : vector<1x64x64xbf16> to vector<64x64xbf16>
    %cst_15 = arith.constant dense<0.000000e+00> : vector<16x64xf32>
    %21 = tpu.matmul %18, %20, %cst_15 {dimension_numbers = #tpu.dot_dimension_numbers<[1], [0], [0], [1], [0, 0, 1, 1], [], []>} : vector<16x64xbf16>, vector<64x64xbf16>, vector<16x64xf32> -> vector<16x64xf32>
    %c2_16 = arith.constant 2 : index
    %c0_17 = arith.constant 0 : index
    %c0_18 = arith.constant 0 : index
    %22 = vector.load %arg3[%c2_16, %c0_17, %c0_18] : memref<4x1x64xf32, #tpu.memory_space<vmem>>, vector<1x1x64xf32>
    %23 = vector.shape_cast %22 : vector<1x1x64xf32> to vector<1x64xf32>
    %24 = vector.broadcast %23 : vector<1x64xf32> to vector<16x64xf32>
    %25 = arith.addf %21, %24 : vector<16x64xf32>
    %26 = arith.truncf %25 : vector<16x64xf32> to vector<16x64xbf16>
    %27 = math.tanh %26 : vector<16x64xbf16>
    %c3 = arith.constant 3 : index
    %c0_19 = arith.constant 0 : index
    %c0_20 = arith.constant 0 : index
    %28 = vector.load %arg2[%c3, %c0_19, %c0_20] : memref<4x64x64xbf16, #tpu.memory_space<vmem>>, vector<1x64x64xbf16>
    %29 = vector.shape_cast %28 : vector<1x64x64xbf16> to vector<64x64xbf16>
    %cst_21 = arith.constant dense<0.000000e+00> : vector<16x64xf32>
    %30 = tpu.matmul %27, %29, %cst_21 {dimension_numbers = #tpu.dot_dimension_numbers<[1], [0], [0], [1], [0, 0, 1, 1], [], []>} : vector<16x64xbf16>, vector<64x64xbf16>, vector<16x64xf32> -> vector<16x64xf32>
    %c3_22 = arith.constant 3 : index
    %c0_23 = arith.constant 0 : index
    %c0_24 = arith.constant 0 : index
    %31 = vector.load %arg3[%c3_22, %c0_23, %c0_24] : memref<4x1x64xf32, #tpu.memory_space<vmem>>, vector<1x1x64xf32>
    %32 = vector.shape_cast %31 : vector<1x1x64xf32> to vector<1x64xf32>
    %33 = vector.broadcast %32 : vector<1x64xf32> to vector<16x64xf32>
    %34 = arith.addf %30, %33 : vector<16x64xf32>
    %35 = math.tanh %34 : vector<16x64xf32>
    %c0_25 = arith.constant 0 : index
    %c0_26 = arith.constant 0 : index
    %36 = vector.load %arg4[%c0_25, %c0_26] : memref<16x64xf32, #tpu.memory_space<vmem>>, vector<16x64xf32>
    tpu.vector_store %arg4[%c0_25, %c0_26], %35 {strides = array<i32>} : memref<16x64xf32, #tpu.memory_space<vmem>>, vector<16x64xf32>,
    return
  }
  func.func @transform_0(%arg0: i32) -> (i32, i32) {
    %c0_i32 = arith.constant 0 : i32
    %c0_i32_0 = arith.constant 0 : i32
    return %arg0, %c0_i32 : i32, i32
  }
  func.func @transform_1(%arg0: i32) -> (i32, i32, i32) {
    %c0_i32 = arith.constant 0 : i32
    %c0_i32_0 = arith.constant 0 : i32
    %c0_i32_1 = arith.constant 0 : i32
    %c0_i32_2 = arith.constant 0 : i32
    return %c0_i32, %c0_i32_0, %c0_i32_1 : i32, i32, i32
  }
  func.func @transform_2(%arg0: i32) -> (i32, i32, i32) {
    %c0_i32 = arith.constant 0 : i32
    %c0_i32_0 = arith.constant 0 : i32
    %c0_i32_1 = arith.constant 0 : i32
    %c0_i32_2 = arith.constant 0 : i32
    return %c0_i32, %c0_i32_0, %c0_i32_1 : i32, i32, i32
  }
  func.func @transform_3(%arg0: i32) -> (i32, i32) {
    %c0_i32 = arith.constant 0 : i32
    %c0_i32_0 = arith.constant 0 : i32
    return %arg0, %c0_i32 : i32, i32
  }
}

</mosaic_0001>

<llo_original>
// kernel: stacked_autoencoder_forward.1
$region0: #{stacked_autoencoder_forward.1}
  #allocation0 [shape = 'u32[]', space=smem, size = 0x4, offset = 0x4, fixed_abs, tag = 'smem constant byte address 0x4 - core index']
  #allocation1 [shape = 'u32[72,128]{1,0:T(1,128)}', space=vmem, size = 0x9000, scoped, tag = 'internal scratch']
  %s0 = inlined_call_operand.vmem [shape: bf16[16,64], index: 0, kind: input, shape index: {}]
  %s1 = inlined_call_operand.hbm [shape: bf16[4,64,64], index: 1, kind: input, shape index: {}]
  %s2 = inlined_call_operand.vmem [shape: f32[4,1,64], index: 2, kind: input, shape index: {}]
  %s3 = inlined_call_operand.vmem [shape: f32[16,64], index: 3, kind: output, shape index: {}]
  %s4 = sld [smem:[#allocation0]]
  $region26: #{stacked_autoencoder_forward.1} parent=0
    _
  %s6 = ssub.s32 1, %s4
  %s7 = scalar_select 0, %s6, %s4
  $region1: #{stacked_autoencoder_forward.1} parent=0
    #allocation2 [shape = 'u8[65536]{0}', space=vmem, size = 0x10000, scoped, tag = 'input window, operand 1, single buffered']
    #allocation3 [shape = 's32[1]{0}', space=sflag, size = 0x4, scoped, tag = 'scoped memory for stacked_autoencoder_forward.1']
    %8 = vsyncpa [#allocation3], 0
    // Predicated region
    $region2: #{stacked_autoencoder_forward.1} parent=1 // pred_check
      _
    $region3: #{stacked_autoencoder_forward.1} parent=1 // pred_check_branch
      %10 = sbr.rel (0) target = $region5
    $region4: #{stacked_autoencoder_forward.1} parent=1 // pred_region
      _
    $region5: #{stacked_autoencoder_forward.1} parent=1 // pred_fallthru
      _
    // Predicated region
    $region6: #{stacked_autoencoder_forward.1} parent=1 // pred_check
      _
    $region7: #{stacked_autoencoder_forward.1} parent=1 // pred_check_branch
      %12 = sbr.rel (0) target = $region9
    $region8: #{stacked_autoencoder_forward.1} parent=1 // pred_region
      %14 = vsyncadd [#allocation3], 0
      %s15 = sshll.u32 %s1, 4
      %s16 = int_to_ptr.hbm [resolvable:$true] %s15
      %s17 = sshll.u32 [#allocation2], 4
      %s18 = int_to_ptr.vmem [resolvable:$true] %s17
      %23 = dma.hbm_to_vmem [thread:$0]  %s16, 2048, %s18, [#allocation3], 64, 64, 4
    $region9: #{stacked_autoencoder_forward.1} parent=1 // pred_fallthru
      _
    // Predicated region
    $region10: #{stacked_autoencoder_forward.1} parent=1 // pred_check
      _
    $region11: #{stacked_autoencoder_forward.1} parent=1 // pred_check_branch
      %25 = sbr.rel (0) target = $region13
    $region12: #{stacked_autoencoder_forward.1} parent=1 // pred_region
      _
    $region13: #{stacked_autoencoder_forward.1} parent=1 // pred_fallthru
      _
    // Predicated region
    $region14: #{stacked_autoencoder_forward.1} parent=1 // pred_check
      _
    $region15: #{stacked_autoencoder_forward.1} parent=1 // pred_check_branch
      %27 = sbr.rel (0) target = $region17
    $region16: #{stacked_autoencoder_forward.1} parent=1 // pred_region
      %29 = dma.done [#allocation3], 2048
    $region17: #{stacked_autoencoder_forward.1} parent=1 // pred_fallthru
      _
    %v31 = vld [vmem:[%s0] sm:$0xf]
    %v32 = vld [vmem:[%s0 + $0x4] sm:$0xf]
    %v33 = vld [vmem:[#allocation2] sm:$0xf]
    %v34 = vld [vmem:[#allocation2 + $0x4] sm:$0xf]
    %v35 = vld [vmem:[#allocation2 + $0x8] sm:$0xf]
    %v36 = vld [vmem:[#allocation2 + $0xc] sm:$0xf]
    %v37 = vld [vmem:[#allocation2 + $0x10] sm:$0xf]
    %v38 = vld [vmem:[#allocation2 + $0x14] sm:$0xf]
    %v39 = vld [vmem:[#allocation2 + $0x18] sm:$0xf]
    %v40 = vld [vmem:[#allocation2 + $0x1c] sm:$0xf]
    %v41 = vld [vmem:[%s2] sm:$0x1]
    %v43 = vperm.slane %v41, 0
    %v47 = vunpack.c.l.b16 %v31
    %v48 = vunpack.c.l.b16 %v32
    %v49 = vpack.c.b16 %v48, %v47
    %v58 = vunpack.c.l.b16 %v33
    %v59 = vunpack.c.l.b16 %v34
    %v60 = vunpack.c.l.b16 %v35
    %v61 = vunpack.c.l.b16 %v36
    %v62 = vunpack.c.l.b16 %v37
    %v63 = vunpack.c.l.b16 %v38
    %v64 = vunpack.c.l.b16 %v39
    %v65 = vunpack.c.l.b16 %v40
    %v66 = vpack.c.b16 %v59, %v58
    %v67 = vpack.c.b16 %v61, %v60
    %v68 = vpack.c.b16 %v63, %v62
    %v69 = vpack.c.b16 %v65, %v64
    %vm74 = vcmask 523264
    %v76 = vsel %vm74, %v49, 0
    %78 = vmatpush.bf16.msra.mxu0 0
    %79 = vmatpush.bf16.msra.mxu0 0
    %80 = vmatpush.bf16.msra.mxu0 0
    %81 = vmatpush.bf16.msra.mxu0 0
    %82 = vmatpush.bf16.msra.mxu0 %v69
    %83 = vmatpush.bf16.msra.mxu0 %v68
    %84 = vmatpush.bf16.msra.mxu0 %v67
    %85 = vmatpush.bf16.msra.mxu0 %v66
    %86 = vmatmul.bf16.gmra.mxu0 %v76
    %v87 = vpop.f32.mrf.mxu0
    %v88 = vadd.f32 %v43, %v87
    %v89 = vpop.f32.mrf.mxu0
    %v90 = vadd.f32 %v43, %v89
    %91 = vdwg.mxu0
    %v92 = vpack.c.bf16 %v90, %v88
    %v93 = vunpack.c.l.bf16 %v92
    %v94 = vunpack.c.h.bf16 %v92
    %v95 = vtanh.pop %v93
    %v96 = vtanh.pop %v94
    %v97 = vpack.c.bf16 %v96, %v95
    %s98 = scalar_lea.vmem [#allocation2], 32
    %v99 = vld [vmem:[%s98] sm:$0xf]
    %v100 = vld [vmem:[%s98 + $0x4] sm:$0xf]
    %v101 = vld [vmem:[%s98 + $0x8] sm:$0xf]
    %v102 = vld [vmem:[%s98 + $0xc] sm:$0xf]
    %v103 = vld [vmem:[%s98 + $0x10] sm:$0xf]
    %v104 = vld [vmem:[%s98 + $0x14] sm:$0xf]
    %v105 = vld [vmem:[%s98 + $0x18] sm:$0xf]
    %v106 = vld [vmem:[%s98 + $0x1c] sm:$0xf]
    %s107 = scalar_lea.vmem %s2, 1
    %v108 = vld [vmem:[%s107] sm:$0x1]
    %v110 = vperm.slane %v108, 0
    %v120 = vunpack.c.l.b16 %v99
    %v121 = vunpack.c.l.b16 %v100
    %v122 = vunpack.c.l.b16 %v101
    %v123 = vunpack.c.l.b16 %v102
    %v124 = vunpack.c.l.b16 %v103
    %v125 = vunpack.c.l.b16 %v104
    %v126 = vunpack.c.l.b16 %v105
    %v127 = vunpack.c.l.b16 %v106
    %v128 = vpack.c.b16 %v121, %v120
    %v129 = vpack.c.b16 %v123, %v122
    %v130 = vpack.c.b16 %v125, %v124
    %v131 = vpack.c.b16 %v127, %v126
    %v137 = vsel %vm74, %v97, 0
    %139 = vmatpush.bf16.msra.mxu0 0
    %140 = vmatpush.bf16.msra.mxu0 0
    %141 = vmatpush.bf16.msra.mxu0 0
    %142 = vmatpush.bf16.msra.mxu0 0
    %143 = vmatpush.bf16.msra.mxu0 %v131
    %144 = vmatpush.bf16.msra.mxu0 %v130
    %145 = vmatpush.bf16.msra.mxu0 %v129
    %146 = vmatpush.bf16.msra.mxu0 %v128
    %147 = vmatmul.bf16.gmra.mxu0 %v137
    %v148 = vpop.f32.mrf.mxu0
    %v149 = vadd.f32 %v110, %v148
    %v150 = vpop.f32.mrf.mxu0
    %v151 = vadd.f32 %v110, %v150
    %152 = vdwg.mxu0
    %v153 = vpack.c.bf16 %v151, %v149
    %v154 = vunpack.c.l.bf16 %v153
    %v155 = vunpack.c.h.bf16 %v153
    %v156 = vtanh.pop %v154
    %v157 = vtanh.pop %v155
    %v158 = vpack.c.bf16 %v157, %v156
    %s159 = scalar_lea.vmem [#allocation2], 64
    %v160 = vld [vmem:[%s159] sm:$0xf]
    %v161 = vld [vmem:[%s159 + $0x4] sm:$0xf]
    %v162 = vld [vmem:[%s159 + $0x8] sm:$0xf]
    %v163 = vld [vmem:[%s159 + $0xc] sm:$0xf]
    %v164 = vld [vmem:[%s159 + $0x10] sm:$0xf]
    %v165 = vld [vmem:[%s159 + $0x14] sm:$0xf]
    %v166 = vld [vmem:[%s159 + $0x18] sm:$0xf]
    %v167 = vld [vmem:[%s159 + $0x1c] sm:$0xf]
    %s168 = scalar_lea.vmem %s2, 2
    %v169 = vld [vmem:[%s168] sm:$0x1]
    %v171 = vperm.slane %v169, 0
    %v181 = vunpack.c.l.b16 %v160
    %v182 = vunpack.c.l.b16 %v161
    %v183 = vunpack.c.l.b16 %v162
    %v184 = vunpack.c.l.b16 %v163
    %v185 = vunpack.c.l.b16 %v164
    %v186 = vunpack.c.l.b16 %v165
    %v187 = vunpack.c.l.b16 %v166
    %v188 = vunpack.c.l.b16 %v167
    %v189 = vpack.c.b16 %v182, %v181
    %v190 = vpack.c.b16 %v184, %v183
    %v191 = vpack.c.b16 %v186, %v185
    %v192 = vpack.c.b16 %v188, %v187
    %v198 = vsel %vm74, %v158, 0
    %200 = vmatpush.bf16.msra.mxu0 0
    %201 = vmatpush.bf16.msra.mxu0 0
    %202 = vmatpush.bf16.msra.mxu0 0
    %203 = vmatpush.bf16.msra.mxu0 0
    %204 = vmatpush.bf16.msra.mxu0 %v192
    %205 = vmatpush.bf16.msra.mxu0 %v191
    %206 = vmatpush.bf16.msra.mxu0 %v190
    %207 = vmatpush.bf16.msra.mxu0 %v189
    %208 = vmatmul.bf16.gmra.mxu0 %v198
    %v209 = vpop.f32.mrf.mxu0
    %v210 = vadd.f32 %v171, %v209
    %v211 = vpop.f32.mrf.mxu0
    %v212 = vadd.f32 %v171, %v211
    %213 = vdwg.mxu0
    %v214 = vpack.c.bf16 %v212, %v210
    %v215 = vunpack.c.l.bf16 %v214
    %v216 = vunpack.c.h.bf16 %v214
    %v217 = vtanh.pop %v215
    %v218 = vtanh.pop %v216
    %v219 = vpack.c.bf16 %v218, %v217
    %s220 = scalar_lea.vmem [#allocation2], 96
    %v221 = vld [vmem:[%s220] sm:$0xf]
    %v222 = vld [vmem:[%s220 + $0x4] sm:$0xf]
    %v223 = vld [vmem:[%s220 + $0x8] sm:$0xf]
    %v224 = vld [vmem:[%s220 + $0xc] sm:$0xf]
    %v225 = vld [vmem:[%s220 + $0x10] sm:$0xf]
    %v226 = vld [vmem:[%s220 + $0x14] sm:$0xf]
    %v227 = vld [vmem:[%s220 + $0x18] sm:$0xf]
    %v228 = vld [vmem:[%s220 + $0x1c] sm:$0xf]
    %s229 = scalar_lea.vmem %s2, 3
    %v230 = vld [vmem:[%s229] sm:$0x1]
    %v232 = vperm.slane %v230, 0
    %v242 = vunpack.c.l.b16 %v221
    %v243 = vunpack.c.l.b16 %v222
    %v244 = vunpack.c.l.b16 %v223
    %v245 = vunpack.c.l.b16 %v224
    %v246 = vunpack.c.l.b16 %v225
    %v247 = vunpack.c.l.b16 %v226
    %v248 = vunpack.c.l.b16 %v227
    %v249 = vunpack.c.l.b16 %v228
    %v250 = vpack.c.b16 %v243, %v242
    %v251 = vpack.c.b16 %v245, %v244
    %v252 = vpack.c.b16 %v247, %v246
    %v253 = vpack.c.b16 %v249, %v248
    %v259 = vsel %vm74, %v219, 0
    %261 = vmatpush.bf16.msra.mxu0 0
    %262 = vmatpush.bf16.msra.mxu0 0
    %263 = vmatpush.bf16.msra.mxu0 0
    %264 = vmatpush.bf16.msra.mxu0 0
    %265 = vmatpush.bf16.msra.mxu0 %v253
    %266 = vmatpush.bf16.msra.mxu0 %v252
    %267 = vmatpush.bf16.msra.mxu0 %v251
    %268 = vmatpush.bf16.msra.mxu0 %v250
    %269 = vmatmul.bf16.gmra.mxu0 %v259
    %v270 = vpop.f32.mrf.mxu0
    %v271 = vadd.f32 %v232, %v270
    %v272 = vpop.f32.mrf.mxu0
    %v273 = vadd.f32 %v232, %v272
    %274 = vdwg.mxu0
    %v275 = vtanh.pop %v271
    %v276 = vtanh.pop %v273
    %277 = vst.msk [vmem:[%s3] sm:$0xff] %vm74, %v275
    %278 = vst.msk [vmem:[%s3 + $0x8] sm:$0xff] %vm74, %v276
    // Predicated region
    $region18: #{stacked_autoencoder_forward.1} parent=1 // pred_check
      _
    $region19: #{stacked_autoencoder_forward.1} parent=1 // pred_check_branch
      %280 = sbr.rel (0) target = $region21
    $region20: #{stacked_autoencoder_forward.1} parent=1 // pred_region
      _
    $region21: #{stacked_autoencoder_forward.1} parent=1 // pred_fallthru
      _
    // Predicated region
    $region22: #{stacked_autoencoder_forward.1} parent=1 // pred_check
      _
    $region23: #{stacked_autoencoder_forward.1} parent=1 // pred_check_branch
      %282 = sbr.rel (0) target = $region25
    $region24: #{stacked_autoencoder_forward.1} parent=1 // pred_region
      _
    $region25: #{stacked_autoencoder_forward.1} parent=1 // pred_fallthru
      _
    %283 = vsyncpa [#allocation3], 1

</llo_original>
